<compile_context>
chip_gen: v7x
topology: tpu7x:2x2x1
jax: 0.10.0
libtpu: 0.0.40
codegen_flags: <defaults>
</compile_context>

<pallas_src>
import jax
import jax.numpy as jnp
from jax.experimental import pallas as pl
from jax.experimental.pallas import tpu as pltpu

LANES = 128
SUBLANES = 8
MAX_BLOCK_ROWS = 8192        # 8192x128 f32 tile = 4 MiB
CHUNK_ROWS = 512             # in-kernel sub-chunk (bounds live temporaries)
_PAD_LOGIT = -1e9            # sigmoid(pad)=0 and BCE(pad, target=0)=0 exactly
_VMEM_LIMIT = 32 * 1024 * 1024


def _round_up(a, b):
    return ((a + b - 1) // b) * b


def _default_num_shards():
    """Use 2 grid shards only when the chip exposes >1 TensorCore; else 1."""
    try:
        info = pltpu.get_tpu_info()
    except Exception:
        return 2
    for attr in ("num_cores", "core_count", "num_tensorcores",
                 "tensorcores_per_chip"):
        v = getattr(info, attr, None)
        if isinstance(v, int) and v > 0:
            return min(2, v)
    return 2


def _make_kernel(rows, steps, block_rows, chunk_rows, num_chunks):
    def kernel(x_ref, t_ref, pt_ref, pts_ref, bce_ref):
        step = pl.program_id(1)

        @pl.when(step == 0)
        def _init():
            pt_ref[...] = jnp.zeros_like(pt_ref)
            pts_ref[...] = jnp.zeros_like(pts_ref)
            bce_ref[...] = jnp.zeros_like(bce_ref)

        # Nominal (unclamped) first row of this block in the global slab.
        block_row0 = (pl.program_id(0) * steps + step) * block_rows

        def accumulate(x, t):
            # Stable sigmoid + log-sigmoid sharing one exp and one log:
            #   e = exp(-|x|)
            #   sigmoid(x)        = where(x>=0, 1, e) / (1+e)
            #   log(sigmoid(x))   = min(x, 0)  - log(1+e)
            #   log(1-sigmoid(x)) = min(-x, 0) - log(1+e)
            e = jnp.exp(-jnp.abs(x))
            one_p_e = 1.0 + e
            log1pe = jnp.log(one_p_e)
            r = 1.0 / one_p_e
            p = jnp.where(x >= 0.0, r, e * r)

            # PyTorch F.binary_cross_entropy clamps the log terms at -100.
            log_p = jnp.maximum(jnp.minimum(x, 0.0) - log1pe, -100.0)
            log_1mp = jnp.maximum(jnp.minimum(-x, 0.0) - log1pe, -100.0)
            bce = -(log_1mp + t * (log_p - log_1mp))

            cr = x.shape[0]

            def fold(v):
                # (cr, 128) -> (8, 128): pure vreg-wise VPU adds.
                return jnp.sum(v.reshape(cr // SUBLANES, SUBLANES, LANES), axis=0)

            pt_ref[...] += fold(p * t)[None]
            pts_ref[...] += fold(p + t)[None]       # dice only needs sum(p)+sum(t)
            bce_ref[...] += fold(bce)[None]

        @pl.loop(0, num_chunks)
        def _chunk(j):
            start = pl.multiple_of(j * chunk_rows, chunk_rows)
            xv = x_ref[pl.ds(start, chunk_rows), :].astype(jnp.float32)
            tv = t_ref[pl.ds(start, chunk_rows), :].astype(jnp.float32)
            row0 = block_row0 + j * chunk_rows

            @pl.when(row0 + chunk_rows <= rows)
            def _interior():                      # fully valid: no mask cost
                accumulate(xv, tv)

            @pl.when(row0 + chunk_rows > rows)
            def _edge():                          # ragged tail / clamped block
                rid = jax.lax.broadcasted_iota(
                    jnp.int32, (chunk_rows, LANES), 0) + row0
                m = rid < rows
                # Mask BEFORE exp/log so edge-block garbage (possibly NaN)
                # never reaches the transcendentals or the sums.
                accumulate(jnp.where(m, xv, _PAD_LOGIT),
                           jnp.where(m, tv, 0.0))

    return kernel


def dice_bce_loss(inputs, targets, smooth=1.0):
    """JAX/Pallas equivalent of DiceBCELoss.forward(inputs, targets)."""
    x = jnp.reshape(inputs, (-1,))
    t = jnp.reshape(targets, (-1,))      # keep native dtype; cast in-kernel
    n = x.shape[0]

    # Pad only the ragged tail (<= 1023 elements) so the flat vector reshapes
    # into a lane-dense, sublane-aligned (rows, 128) slab.  Pad values are
    # chosen so they contribute exactly zero to every partial sum.  Everything
    # past `rows` (over-fetched edge blocks) is masked in-kernel rather than
    # materialised in HBM.
    n_slab = _round_up(n, SUBLANES * LANES)
    if n_slab != n:
        pad = n_slab - n
        x = jnp.concatenate([x, jnp.full((pad,), _PAD_LOGIT, x.dtype)])
        t = jnp.concatenate([t, jnp.zeros((pad,), t.dtype)])
    rows = n_slab // LANES
    x2 = x.reshape(rows, LANES)
    t2 = t.reshape(rows, LANES)

    num_shards = _default_num_shards()
    rows_per_shard = pl.cdiv(rows, num_shards)
    if rows_per_shard >= CHUNK_ROWS:
        block_rows = min(MAX_BLOCK_ROWS, _round_up(rows_per_shard, CHUNK_ROWS))
    else:
        block_rows = _round_up(rows_per_shard, SUBLANES)
    chunk_rows = min(CHUNK_ROWS, block_rows)
    num_chunks = block_rows // chunk_rows

    num_row_blocks = pl.cdiv(rows, block_rows)
    steps = pl.cdiv(num_row_blocks, num_shards)
    last_block = num_row_blocks - 1

    # Blocks whose nominal index runs past the slab are clamped onto the last
    # valid block; their rows are fully masked in-kernel, so the data read
    # there is irrelevant.
    in_spec = pl.BlockSpec(
        (block_rows, LANES),
        lambda c, i: (jnp.minimum(c * steps + i, last_block), 0))
    part_shape = jax.ShapeDtypeStruct((num_shards, SUBLANES, LANES), jnp.float32)
    part_spec = pl.BlockSpec((1, SUBLANES, LANES), lambda c, i: (c, 0, 0))

    kernel = _make_kernel(rows, steps, block_rows, chunk_rows, num_chunks)

    pt_part, pts_part, bce_part = pl.pallas_call(
        kernel,
        out_shape=(part_shape,) * 3,
        grid_spec=pltpu.PrefetchScalarGridSpec(
            num_scalar_prefetch=0,
            grid=(num_shards, steps),
            in_specs=[in_spec, in_spec],
            out_specs=[part_spec] * 3,
        ),
        compiler_params=pltpu.CompilerParams(
            dimension_semantics=("parallel", "arbitrary"),
            vmem_limit_bytes=_VMEM_LIMIT),
    )(x2, t2)

    # Tiny finalize (O(shards*8*128)): cross-lane/shard reduce + combine.
    intersection = jnp.sum(pt_part)
    union = jnp.sum(pts_part)                     # sum(p) + sum(t)
    bce = jnp.sum(bce_part) / jnp.float32(n)
    dice = 1.0 - (2.0 * intersection + smooth) / (union + smooth)
    return bce + dice


def _reference(inputs, targets, smooth=1.0):
    p = jax.nn.sigmoid(inputs.astype(jnp.float32)).reshape(-1)
    t = targets.reshape(-1).astype(jnp.float32)
    inter = jnp.sum(p * t)
    dice = 1.0 - (2.0 * inter + smooth) / (jnp.sum(p) + jnp.sum(t) + smooth)
    bce = jnp.mean(-(t * jnp.maximum(jnp.log(p), -100.0)
                     + (1.0 - t) * jnp.maximum(jnp.log(1.0 - p), -100.0)))
    return bce + dice


if __name__ == "__main__":
    key = jax.random.PRNGKey(0)
    k1, k2, k3, k4, k5, k6 = jax.random.split(key, 6)

    # small NCHW shapes consistent with a segmentation-style loss
    shape = (2, 4, 16, 16)
    logits = jax.random.normal(k1, shape, dtype=jnp.float32)
    targets = (jax.random.uniform(k2, shape) > 0.5).astype(jnp.float32)
    loss = jax.block_until_ready(dice_bce_loss(logits, targets, smooth=1.0))
    ref = _reference(logits, targets, smooth=1.0)
    assert jnp.allclose(loss, ref, rtol=1e-5, atol=1e-5), (loss, ref)

    # ragged element count + bf16 targets: exercises the tiny tail-pad path
    # and the narrow-dtype target DMA.
    shape2 = (2, 3, 15, 17)
    logits2 = jax.random.normal(k3, shape2, dtype=jnp.float32)
    targets2 = (jax.random.uniform(k4, shape2) > 0.5).astype(jnp.bfloat16)
    loss2 = jax.block_until_ready(dice_bce_loss(logits2, targets2))
    ref2 = _reference(logits2, targets2)
    assert jnp.allclose(loss2, ref2, rtol=1e-5, atol=1e-5), (loss2, ref2)

    # larger ragged case: exercises the multi-chunk inner loop and the
    # in-kernel edge-block masking / clamped-block path for 1 or 2 shards.
    shape3 = (2, 5, 124, 125)
    logits3 = jax.random.normal(k5, shape3, dtype=jnp.float32)
    targets3 = (jax.random.uniform(k6, shape3) > 0.5).astype(jnp.float32)
    loss3 = jax.block_until_ready(dice_bce_loss(logits3, targets3))
    ref3 = _reference(logits3, targets3)
    # slightly looser tolerance: f32 reduction over ~155k elements
    assert jnp.allclose(loss3, ref3, rtol=1e-4, atol=1e-5), (loss3, ref3)

    print("KERNEL_OK")
</pallas_src>

<mosaic_0001>
module attributes {stable_mosaic.version = 11 : i64} {
  func.func @kernel(%arg0: i32, %arg1: i32, %arg2: memref<8x128xf32, #tpu.memory_space<vmem>>, %arg3: memref<8x128xf32, #tpu.memory_space<vmem>>, %arg4: memref<1x8x128xf32, #tpu.memory_space<vmem>>, %arg5: memref<1x8x128xf32, #tpu.memory_space<vmem>>, %arg6: memref<1x8x128xf32, #tpu.memory_space<vmem>>) attributes {dimension_semantics = [#tpu.dimension_semantics<parallel>, #tpu.dimension_semantics<arbitrary>], iteration_bounds = array<i64: 2, 1>, scalar_prefetch = 0 : i64, scratch_operands = 0 : i64, tpu.core_type = #tpu.core_type<tc>, window_params = [{transform_indices = @transform_0, window_bounds = array<i64: 8, 128>}, {transform_indices = @transform_1, window_bounds = array<i64: 8, 128>}, {transform_indices = @transform_2, window_bounds = array<i64: 1, 8, 128>}, {transform_indices = @transform_3, window_bounds = array<i64: 1, 8, 128>}, {transform_indices = @transform_4, window_bounds = array<i64: 1, 8, 128>}]} {
    %c0_i32 = arith.constant 0 : i32
    %0 = arith.cmpi eq, %arg1, %c0_i32 : i32
    %1 = arith.extui %0 : i1 to i32
    %c0_i32_0 = arith.constant 0 : i32
    %2 = arith.cmpi ne, %1, %c0_i32_0 : i32
    scf.if %2 {
      %cst = arith.constant 0.000000e+00 : f32
      %24 = vector.broadcast %cst : f32 to vector<1x8x128xf32>
      %c0_13 = arith.constant 0 : index
      %c0_14 = arith.constant 0 : index
      %c0_15 = arith.constant 0 : index
      %25 = vector.load %arg4[%c0_13, %c0_14, %c0_15] : memref<1x8x128xf32, #tpu.memory_space<vmem>>, vector<1x8x128xf32>
      tpu.vector_store %arg4[%c0_13, %c0_14, %c0_15], %24 {strides = array<i32>} : memref<1x8x128xf32, #tpu.memory_space<vmem>>, vector<1x8x128xf32>,
      %cst_16 = arith.constant 0.000000e+00 : f32
      %26 = vector.broadcast %cst_16 : f32 to vector<1x8x128xf32>
      %c0_17 = arith.constant 0 : index
      %c0_18 = arith.constant 0 : index
      %c0_19 = arith.constant 0 : index
      %27 = vector.load %arg5[%c0_17, %c0_18, %c0_19] : memref<1x8x128xf32, #tpu.memory_space<vmem>>, vector<1x8x128xf32>
      tpu.vector_store %arg5[%c0_17, %c0_18, %c0_19], %26 {strides = array<i32>} : memref<1x8x128xf32, #tpu.memory_space<vmem>>, vector<1x8x128xf32>,
      %cst_20 = arith.constant 0.000000e+00 : f32
      %28 = vector.broadcast %cst_20 : f32 to vector<1x8x128xf32>
      %c0_21 = arith.constant 0 : index
      %c0_22 = arith.constant 0 : index
      %c0_23 = arith.constant 0 : index
      %29 = vector.load %arg6[%c0_21, %c0_22, %c0_23] : memref<1x8x128xf32, #tpu.memory_space<vmem>>, vector<1x8x128xf32>
      tpu.vector_store %arg6[%c0_21, %c0_22, %c0_23], %28 {strides = array<i32>} : memref<1x8x128xf32, #tpu.memory_space<vmem>>, vector<1x8x128xf32>,
    } else {
    }
    %c1_i32 = arith.constant 1 : i32
    %3 = arith.muli %arg0, %c1_i32 : i32
    %4 = arith.addi %3, %arg1 : i32
    %c8_i32 = arith.constant 8 : i32
    %5 = arith.muli %4, %c8_i32 : i32
    %c0_i32_1 = arith.constant 0 : i32
    %c1_i32_2 = arith.constant 1 : i32
    %6 = arith.muli %c0_i32_1, %c1_i32_2 : i32
    %c0_i32_3 = arith.constant 0 : i32
    %7 = arith.addi %c0_i32_3, %6 : i32
    %c8_i32_4 = arith.constant 8 : i32
    %8 = arith.muli %7, %c8_i32_4 : i32
    %9 = tpu.assume_multiple %8, 8 : i32
    %10 = arith.index_cast %9 : i32 to index
    %c0 = arith.constant 0 : index
    %11 = vector.load %arg2[%10, %c0] : memref<8x128xf32, #tpu.memory_space<vmem>>, vector<8x128xf32>
    %12 = arith.index_cast %9 : i32 to index
    %c0_5 = arith.constant 0 : index
    %13 = vector.load %arg3[%12, %c0_5] : memref<8x128xf32, #tpu.memory_space<vmem>>, vector<8x128xf32>
    %c8_i32_6 = arith.constant 8 : i32
    %14 = arith.muli %7, %c8_i32_6 : i32
    %15 = arith.addi %5, %14 : i32
    %c8_i32_7 = arith.constant 8 : i32
    %16 = arith.addi %15, %c8_i32_7 : i32
    %c16_i32 = arith.constant 16 : i32
    %17 = arith.cmpi sle, %16, %c16_i32 : i32
    %18 = arith.extui %17 : i1 to i32
    %c0_i32_8 = arith.constant 0 : i32
    %19 = arith.cmpi ne, %18, %c0_i32_8 : i32
    scf.if %19 {
      %24 = math.absf %11 : vector<8x128xf32>
      %cst = arith.constant 0.000000e+00 : f32
      %25 = vector.broadcast %cst : f32 to vector<8x128xf32>
      %26 = arith.subf %25, %24 : vector<8x128xf32>
      %27 = math.exp %26 : vector<8x128xf32>
      %cst_13 = arith.constant 1.000000e+00 : f32
      %28 = vector.broadcast %cst_13 : f32 to vector<8x128xf32>
      %29 = arith.addf %28, %27 : vector<8x128xf32>
      %30 = math.log %29 : vector<8x128xf32>
      %cst_14 = arith.constant 1.000000e+00 : f32
      %31 = vector.broadcast %cst_14 : f32 to vector<8x128xf32>
      %32 = arith.divf %31, %29 : vector<8x128xf32>
      %cst_15 = arith.constant 0.000000e+00 : f32
      %33 = vector.broadcast %cst_15 : f32 to vector<8x128xf32>
      %34 = arith.cmpf oge, %11, %33 : vector<8x128xf32>
      %35 = arith.mulf %27, %32 : vector<8x128xf32>
      %36 = arith.select %34, %32, %35 : vector<8x128xi1>, vector<8x128xf32>
      %cst_16 = arith.constant 0.000000e+00 : f32
      %37 = vector.broadcast %cst_16 : f32 to vector<8x128xf32>
      %38 = arith.minimumf %11, %37 : vector<8x128xf32>
      %39 = arith.subf %38, %30 : vector<8x128xf32>
      %cst_17 = arith.constant -1.000000e+02 : f32
      %40 = vector.broadcast %cst_17 : f32 to vector<8x128xf32>
      %41 = arith.maximumf %39, %40 : vector<8x128xf32>
      %cst_18 = arith.constant 0.000000e+00 : f32
      %42 = vector.broadcast %cst_18 : f32 to vector<8x128xf32>
      %43 = arith.subf %42, %11 : vector<8x128xf32>
      %cst_19 = arith.constant 0.000000e+00 : f32
      %44 = vector.broadcast %cst_19 : f32 to vector<8x128xf32>
      %45 = arith.minimumf %43, %44 : vector<8x128xf32>
      %46 = arith.subf %45, %30 : vector<8x128xf32>
      %cst_20 = arith.constant -1.000000e+02 : f32
      %47 = vector.broadcast %cst_20 : f32 to vector<8x128xf32>
      %48 = arith.maximumf %46, %47 : vector<8x128xf32>
      %49 = arith.subf %41, %48 : vector<8x128xf32>
      %50 = arith.mulf %13, %49 : vector<8x128xf32>
      %51 = arith.addf %48, %50 : vector<8x128xf32>
      %cst_21 = arith.constant 0.000000e+00 : f32
      %52 = vector.broadcast %cst_21 : f32 to vector<8x128xf32>
      %53 = arith.subf %52, %51 : vector<8x128xf32>
      %c0_22 = arith.constant 0 : index
      %c0_23 = arith.constant 0 : index
      %c0_24 = arith.constant 0 : index
      %54 = vector.load %arg4[%c0_22, %c0_23, %c0_24] : memref<1x8x128xf32, #tpu.memory_space<vmem>>, vector<1x8x128xf32>
      %55 = arith.mulf %36, %13 : vector<8x128xf32>
      %56 = vector.shape_cast %55 : vector<8x128xf32> to vector<1x8x128xf32>
      %cst_25 = arith.constant dense<0.000000e+00> : vector<8x128xf32>
      %57 = vector.multi_reduction <add>, %56, %cst_25 [0] : vector<1x8x128xf32> to vector<8x128xf32>
      %58 = vector.shape_cast %57 : vector<8x128xf32> to vector<1x8x128xf32>
      %59 = arith.addf %54, %58 : vector<1x8x128xf32>
      %c0_26 = arith.constant 0 : index
      %c0_27 = arith.constant 0 : index
      %c0_28 = arith.constant 0 : index
      %60 = vector.load %arg4[%c0_26, %c0_27, %c0_28] : memref<1x8x128xf32, #tpu.memory_space<vmem>>, vector<1x8x128xf32>
      tpu.vector_store %arg4[%c0_26, %c0_27, %c0_28], %59 {strides = array<i32>} : memref<1x8x128xf32, #tpu.memory_space<vmem>>, vector<1x8x128xf32>,
      %c0_29 = arith.constant 0 : index
      %c0_30 = arith.constant 0 : index
      %c0_31 = arith.constant 0 : index
      %61 = vector.load %arg5[%c0_29, %c0_30, %c0_31] : memref<1x8x128xf32, #tpu.memory_space<vmem>>, vector<1x8x128xf32>
      %62 = arith.addf %36, %13 : vector<8x128xf32>
      %63 = vector.shape_cast %62 : vector<8x128xf32> to vector<1x8x128xf32>
      %cst_32 = arith.constant dense<0.000000e+00> : vector<8x128xf32>
      %64 = vector.multi_reduction <add>, %63, %cst_32 [0] : vector<1x8x128xf32> to vector<8x128xf32>
      %65 = vector.shape_cast %64 : vector<8x128xf32> to vector<1x8x128xf32>
      %66 = arith.addf %61, %65 : vector<1x8x128xf32>
      %c0_33 = arith.constant 0 : index
      %c0_34 = arith.constant 0 : index
      %c0_35 = arith.constant 0 : index
      %67 = vector.load %arg5[%c0_33, %c0_34, %c0_35] : memref<1x8x128xf32, #tpu.memory_space<vmem>>, vector<1x8x128xf32>
      tpu.vector_store %arg5[%c0_33, %c0_34, %c0_35], %66 {strides = array<i32>} : memref<1x8x128xf32, #tpu.memory_space<vmem>>, vector<1x8x128xf32>,
      %c0_36 = arith.constant 0 : index
      %c0_37 = arith.constant 0 : index
      %c0_38 = arith.constant 0 : index
      %68 = vector.load %arg6[%c0_36, %c0_37, %c0_38] : memref<1x8x128xf32, #tpu.memory_space<vmem>>, vector<1x8x128xf32>
      %69 = vector.shape_cast %53 : vector<8x128xf32> to vector<1x8x128xf32>
      %cst_39 = arith.constant dense<0.000000e+00> : vector<8x128xf32>
      %70 = vector.multi_reduction <add>, %69, %cst_39 [0] : vector<1x8x128xf32> to vector<8x128xf32>
      %71 = vector.shape_cast %70 : vector<8x128xf32> to vector<1x8x128xf32>
      %72 = arith.addf %68, %71 : vector<1x8x128xf32>
      %c0_40 = arith.constant 0 : index
      %c0_41 = arith.constant 0 : index
      %c0_42 = arith.constant 0 : index
      %73 = vector.load %arg6[%c0_40, %c0_41, %c0_42] : memref<1x8x128xf32, #tpu.memory_space<vmem>>, vector<1x8x128xf32>
      tpu.vector_store %arg6[%c0_40, %c0_41, %c0_42], %72 {strides = array<i32>} : memref<1x8x128xf32, #tpu.memory_space<vmem>>, vector<1x8x128xf32>,
    } else {
    }
    %c8_i32_9 = arith.constant 8 : i32
    %20 = arith.addi %15, %c8_i32_9 : i32
    %c16_i32_10 = arith.constant 16 : i32
    %21 = arith.cmpi sgt, %20, %c16_i32_10 : i32
    %22 = arith.extui %21 : i1 to i32
    %c0_i32_11 = arith.constant 0 : i32
    %23 = arith.cmpi ne, %22, %c0_i32_11 : i32
    scf.if %23 {
      %24 = tpu.iota {dimensions = array<i32: 0>} : vector<8x128xi32>
      %25 = vector.broadcast %15 : i32 to vector<8x128xi32>
      %26 = arith.addi %24, %25 : vector<8x128xi32>
      %c16_i32_13 = arith.constant 16 : i32
      %27 = vector.broadcast %c16_i32_13 : i32 to vector<8x128xi32>
      %28 = arith.cmpi slt, %26, %27 : vector<8x128xi32>
      %cst = arith.constant -1.000000e+09 : f32
      %29 = vector.broadcast %cst : f32 to vector<8x128xf32>
      %30 = arith.select %28, %11, %29 : vector<8x128xi1>, vector<8x128xf32>
      %cst_14 = arith.constant 0.000000e+00 : f32
      %31 = vector.broadcast %cst_14 : f32 to vector<8x128xf32>
      %32 = arith.select %28, %13, %31 : vector<8x128xi1>, vector<8x128xf32>
      %33 = math.absf %30 : vector<8x128xf32>
      %cst_15 = arith.constant 0.000000e+00 : f32
      %34 = vector.broadcast %cst_15 : f32 to vector<8x128xf32>
      %35 = arith.subf %34, %33 : vector<8x128xf32>
      %36 = math.exp %35 : vector<8x128xf32>
      %cst_16 = arith.constant 1.000000e+00 : f32
      %37 = vector.broadcast %cst_16 : f32 to vector<8x128xf32>
      %38 = arith.addf %37, %36 : vector<8x128xf32>
      %39 = math.log %38 : vector<8x128xf32>
      %cst_17 = arith.constant 1.000000e+00 : f32
      %40 = vector.broadcast %cst_17 : f32 to vector<8x128xf32>
      %41 = arith.divf %40, %38 : vector<8x128xf32>
      %cst_18 = arith.constant 0.000000e+00 : f32
      %42 = vector.broadcast %cst_18 : f32 to vector<8x128xf32>
      %43 = arith.cmpf oge, %30, %42 : vector<8x128xf32>
      %44 = arith.mulf %36, %41 : vector<8x128xf32>
      %45 = arith.select %43, %41, %44 : vector<8x128xi1>, vector<8x128xf32>
      %cst_19 = arith.constant 0.000000e+00 : f32
      %46 = vector.broadcast %cst_19 : f32 to vector<8x128xf32>
      %47 = arith.minimumf %30, %46 : vector<8x128xf32>
      %48 = arith.subf %47, %39 : vector<8x128xf32>
      %cst_20 = arith.constant -1.000000e+02 : f32
      %49 = vector.broadcast %cst_20 : f32 to vector<8x128xf32>
      %50 = arith.maximumf %48, %49 : vector<8x128xf32>
      %cst_21 = arith.constant 0.000000e+00 : f32
      %51 = vector.broadcast %cst_21 : f32 to vector<8x128xf32>
      %52 = arith.subf %51, %30 : vector<8x128xf32>
      %cst_22 = arith.constant 0.000000e+00 : f32
      %53 = vector.broadcast %cst_22 : f32 to vector<8x128xf32>
      %54 = arith.minimumf %52, %53 : vector<8x128xf32>
      %55 = arith.subf %54, %39 : vector<8x128xf32>
      %cst_23 = arith.constant -1.000000e+02 : f32
      %56 = vector.broadcast %cst_23 : f32 to vector<8x128xf32>
      %57 = arith.maximumf %55, %56 : vector<8x128xf32>
      %58 = arith.subf %50, %57 : vector<8x128xf32>
      %59 = arith.mulf %32, %58 : vector<8x128xf32>
      %60 = arith.addf %57, %59 : vector<8x128xf32>
      %cst_24 = arith.constant 0.000000e+00 : f32
      %61 = vector.broadcast %cst_24 : f32 to vector<8x128xf32>
      %62 = arith.subf %61, %60 : vector<8x128xf32>
      %c0_25 = arith.constant 0 : index
      %c0_26 = arith.constant 0 : index
      %c0_27 = arith.constant 0 : index
      %63 = vector.load %arg4[%c0_25, %c0_26, %c0_27] : memref<1x8x128xf32, #tpu.memory_space<vmem>>, vector<1x8x128xf32>
      %64 = arith.mulf %45, %32 : vector<8x128xf32>
      %65 = vector.shape_cast %64 : vector<8x128xf32> to vector<1x8x128xf32>
      %cst_28 = arith.constant dense<0.000000e+00> : vector<8x128xf32>
      %66 = vector.multi_reduction <add>, %65, %cst_28 [0] : vector<1x8x128xf32> to vector<8x128xf32>
      %67 = vector.shape_cast %66 : vector<8x128xf32> to vector<1x8x128xf32>
      %68 = arith.addf %63, %67 : vector<1x8x128xf32>
      %c0_29 = arith.constant 0 : index
      %c0_30 = arith.constant 0 : index
      %c0_31 = arith.constant 0 : index
      %69 = vector.load %arg4[%c0_29, %c0_30, %c0_31] : memref<1x8x128xf32, #tpu.memory_space<vmem>>, vector<1x8x128xf32>
      tpu.vector_store %arg4[%c0_29, %c0_30, %c0_31], %68 {strides = array<i32>} : memref<1x8x128xf32, #tpu.memory_space<vmem>>, vector<1x8x128xf32>,
      %c0_32 = arith.constant 0 : index
      %c0_33 = arith.constant 0 : index
      %c0_34 = arith.constant 0 : index
      %70 = vector.load %arg5[%c0_32, %c0_33, %c0_34] : memref<1x8x128xf32, #tpu.memory_space<vmem>>, vector<1x8x128xf32>
      %71 = arith.addf %45, %32 : vector<8x128xf32>
      %72 = vector.shape_cast %71 : vector<8x128xf32> to vector<1x8x128xf32>
      %cst_35 = arith.constant dense<0.000000e+00> : vector<8x128xf32>
      %73 = vector.multi_reduction <add>, %72, %cst_35 [0] : vector<1x8x128xf32> to vector<8x128xf32>
      %74 = vector.shape_cast %73 : vector<8x128xf32> to vector<1x8x128xf32>
      %75 = arith.addf %70, %74 : vector<1x8x128xf32>
      %c0_36 = arith.constant 0 : index
      %c0_37 = arith.constant 0 : index
      %c0_38 = arith.constant 0 : index
      %76 = vector.load %arg5[%c0_36, %c0_37, %c0_38] : memref<1x8x128xf32, #tpu.memory_space<vmem>>, vector<1x8x128xf32>
      tpu.vector_store %arg5[%c0_36, %c0_37, %c0_38], %75 {strides = array<i32>} : memref<1x8x128xf32, #tpu.memory_space<vmem>>, vector<1x8x128xf32>,
      %c0_39 = arith.constant 0 : index
      %c0_40 = arith.constant 0 : index
      %c0_41 = arith.constant 0 : index
      %77 = vector.load %arg6[%c0_39, %c0_40, %c0_41] : memref<1x8x128xf32, #tpu.memory_space<vmem>>, vector<1x8x128xf32>
      %78 = vector.shape_cast %62 : vector<8x128xf32> to vector<1x8x128xf32>
      %cst_42 = arith.constant dense<0.000000e+00> : vector<8x128xf32>
      %79 = vector.multi_reduction <add>, %78, %cst_42 [0] : vector<1x8x128xf32> to vector<8x128xf32>
      %80 = vector.shape_cast %79 : vector<8x128xf32> to vector<1x8x128xf32>
      %81 = arith.addf %77, %80 : vector<1x8x128xf32>
      %c0_43 = arith.constant 0 : index
      %c0_44 = arith.constant 0 : index
      %c0_45 = arith.constant 0 : index
      %82 = vector.load %arg6[%c0_43, %c0_44, %c0_45] : memref<1x8x128xf32, #tpu.memory_space<vmem>>, vector<1x8x128xf32>
      tpu.vector_store %arg6[%c0_43, %c0_44, %c0_45], %81 {strides = array<i32>} : memref<1x8x128xf32, #tpu.memory_space<vmem>>, vector<1x8x128xf32>,
    } else {
    }
    %c1_i32_12 = arith.constant 1 : i32
    return
  }
  func.func @transform_0(%arg0: i32, %arg1: i32) -> (i32, i32) {
    %c1_i32 = arith.constant 1 : i32
    %0 = arith.muli %arg0, %c1_i32 : i32
    %1 = arith.addi %0, %arg1 : i32
    %c1_i32_0 = arith.constant 1 : i32
    %2 = arith.minsi %1, %c1_i32_0 : i32
    %c0_i32 = arith.constant 0 : i32
    %c0_i32_1 = arith.constant 0 : i32
    return %2, %c0_i32 : i32, i32
  }
  func.func @transform_1(%arg0: i32, %arg1: i32) -> (i32, i32) {
    %c1_i32 = arith.constant 1 : i32
    %0 = arith.muli %arg0, %c1_i32 : i32
    %1 = arith.addi %0, %arg1 : i32
    %c1_i32_0 = arith.constant 1 : i32
    %2 = arith.minsi %1, %c1_i32_0 : i32
    %c0_i32 = arith.constant 0 : i32
    %c0_i32_1 = arith.constant 0 : i32
    return %2, %c0_i32 : i32, i32
  }
  func.func @transform_2(%arg0: i32, %arg1: i32) -> (i32, i32, i32) {
    %c0_i32 = arith.constant 0 : i32
    %c0_i32_0 = arith.constant 0 : i32
    %c0_i32_1 = arith.constant 0 : i32
    return %arg0, %c0_i32, %c0_i32_0 : i32, i32, i32
  }
  func.func @transform_3(%arg0: i32, %arg1: i32) -> (i32, i32, i32) {
    %c0_i32 = arith.constant 0 : i32
    %c0_i32_0 = arith.constant 0 : i32
    %c0_i32_1 = arith.constant 0 : i32
    return %arg0, %c0_i32, %c0_i32_0 : i32, i32, i32
  }
  func.func @transform_4(%arg0: i32, %arg1: i32) -> (i32, i32, i32) {
    %c0_i32 = arith.constant 0 : i32
    %c0_i32_0 = arith.constant 0 : i32
    %c0_i32_1 = arith.constant 0 : i32
    return %arg0, %c0_i32, %c0_i32_0 : i32, i32, i32
  }
}

</mosaic_0001>

<llo_original>
// kernel: tpu_custom_call.1
$region0: #{tpu_custom_call.1}
  #allocation0 [shape = 'u32[]', space=smem, size = 0x4, offset = 0x4, fixed_abs, tag = 'smem constant byte address 0x4 - core index']
  #allocation1 [shape = 'u32[144,128]{1,0:T(1,128)}', space=vmem, size = 0x12000, scoped, tag = 'internal scratch']
  %s0 = inlined_call_operand.hbm [shape: f32[16,128], index: 0, kind: input, shape index: {}]
  %s1 = inlined_call_operand.hbm [shape: f32[16,128], index: 1, kind: input, shape index: {}]
  %s2 = inlined_call_operand.hbm [shape: f32[2,8,128], index: 2, kind: output, shape index: {0}]
  %s3 = inlined_call_operand.hbm [shape: f32[2,8,128], index: 3, kind: output, shape index: {1}]
  %s4 = inlined_call_operand.hbm [shape: f32[2,8,128], index: 4, kind: output, shape index: {2}]
  %5 = xla_tuple %s2, %s3, %s4
  %s6 = sld [smem:[#allocation0]]
  $region77: #{tpu_custom_call.1} parent=0
    _
  %s8 = ssub.s32 1, %s6
  %s9 = scalar_select 0, %s8, %s6
  $region1: #{tpu_custom_call.1} parent=0
    #allocation2 [shape = 'u8[8192]{0}', space=vmem, size = 0x2000, scoped, tag = 'input window, operand 0']
    #allocation3 [shape = 's32[2]{0}', space=sflag, size = 0x8, scoped, tag = 'scoped memory for tpu_custom_call.1']
    #allocation4 [shape = 's32[2]{0}', space=sflag, size = 0x8, scoped, tag = 'scoped memory for tpu_custom_call.1']
    #allocation5 [shape = 'u8[8192]{0}', space=vmem, size = 0x2000, scoped, tag = 'input window, operand 1']
    #allocation6 [shape = 's32[2]{0}', space=sflag, size = 0x8, scoped, tag = 'scoped memory for tpu_custom_call.1']
    #allocation7 [shape = 'u8[8192]{0}', space=vmem, size = 0x2000, scoped, tag = 'output window, operand 0']
    #allocation8 [shape = 'u8[8192]{0}', space=vmem, size = 0x2000, scoped, tag = 'output window, operand 1']
    #allocation9 [shape = 's32[2]{0}', space=sflag, size = 0x8, scoped, tag = 'scoped memory for tpu_custom_call.1']
    #allocation10 [shape = 'u8[8192]{0}', space=vmem, size = 0x2000, scoped, tag = 'output window, operand 2']
    %10 = vsyncpa [#allocation3], 0
    %s11 = scalar_lea.sflag [#allocation3], 1
    %12 = vsyncpa %s11, 0
    %13 = vsyncpa [#allocation6], 0
    %s14 = scalar_lea.sflag [#allocation6], 1
    %15 = vsyncpa %s14, 0
    %16 = vsyncpa [#allocation4], 0
    %s17 = scalar_lea.sflag [#allocation4], 1
    %18 = vsyncpa %s17, 0
    %19 = vsyncpa [#allocation9], 0
    %s20 = scalar_lea.sflag [#allocation9], 1
    %21 = vsyncpa %s20, 0
    loop: start=0, step=1, limit=4
    $region2: #{tpu_custom_call.1} parent=1 // loop_pre_header
      _
    $region3: #{tpu_custom_call.1} parent=1 // loop_header
      %s23 = sphi 0, %s27
      %p24 = scmp.ge.s32.totalorder %s23, 4
      %s30 = sphi 0, %s42
      %s31 = sphi 0, %s38
      %s32 = sphi 0, %s30
      %s33 = sphi 0, %s31
      %s34 = sphi 0, %s32
      %s35 = sphi 0, %s33
      %s51 = sphi 0, %s53
      %s54 = sphi 0, %s51
      %s55 = sphi 0, %s54
      %s71 = sphi 0, %s55
      %s83 = sphi 0, %s85
      %s86 = sphi 0, %s83
      %s87 = sphi 0, %s86
      %s103 = sphi 0, %s87
      %s109 = sphi 0, %s111
      %s112 = sphi 0, %s109
      %s113 = sphi 0, %s112
      %s129 = sphi 0, %s113
      %s135 = sphi 0, %s137
      %s138 = sphi 0, %s135
      %s139 = sphi 0, %s138
      %s155 = sphi 0, %s139
      %s161 = sphi 0, %s163
      %s164 = sphi 0, %s161
      %s165 = sphi 0, %s164
      %s181 = sphi 0, %s165
    $region4: #{tpu_custom_call.1} parent=1 // loop_header_branch
      %26 = sbr.rel (%p24) target = $region8
    $region5: #{tpu_custom_call.1} parent=1 // loop_body
      %s28 = ssub.s32 %s23, 1
      %s29 = ssub.s32 %s23, 2
      %s36 = sadd.s32 1, %s31
      %p37 = scmp.ge.s32.totalorder %s36, 1
      %s38 = scalar_select %p37, 0, %s36
      %s39 = sadd.s32 1, %s30
      %s40 = scalar_select %p37, %s39, %s30
      %p41 = scmp.ge.s32.totalorder %s40, 2
      %s42 = scalar_select %p41, 0, %s40
      %s43 = sadd.s32 %s30, %s31
      %p44 = scmp.lt.s32.totalorder %s43, 1
      %s45 = scalar_select %p44, %s43, 1
      %s46 = sadd.s32 %s42, %s38
      %p47 = scmp.lt.s32.totalorder %s46, 1
      %s48 = scalar_select %p47, %s46, 1
      %s49 = ssub.s32 %s45, %s48
      %p50 = scmp.eq.s32.totalorder %s49, 0
      %s52 = sadd.s32 %s51, 1
      %s53 = scalar_select %p50, %s51, %s52
      %p56 = pneg %p50
      %p57 = scmp.eq.s32.totalorder %s23, 1
      %p58 = por %p56, %p57
      %p59 = scmp.ne.s32.totalorder %s51, %s54
      %p60 = scmp.eq.s32.totalorder %s23, 0
      %p61 = por %p59, %p60
      %p62 = scmp.ne.s32.totalorder %s51, %s54
      %p63 = scmp.eq.s32.totalorder %s28, 1
      %p64 = por %p62, %p63
      %p65 = scmp.ne.s32.totalorder %s54, %s55
      %p66 = scmp.eq.s32.totalorder %s28, 0
      %p67 = por %p65, %p66
      %p68 = scmp.ne.s32.totalorder %s54, %s55
      %p69 = scmp.eq.s32.totalorder %s29, 1
      %p70 = por %p68, %p69
      %p72 = scmp.ne.s32.totalorder %s55, %s71
      %p73 = scmp.eq.s32.totalorder %s29, 0
      %p74 = por %p72, %p73
      %s75 = sadd.s32 %s30, %s31
      %p76 = scmp.lt.s32.totalorder %s75, 1
      %s77 = scalar_select %p76, %s75, 1
      %s78 = sadd.s32 %s42, %s38
      %p79 = scmp.lt.s32.totalorder %s78, 1
      %s80 = scalar_select %p79, %s78, 1
      %s81 = ssub.s32 %s77, %s80
      %p82 = scmp.eq.s32.totalorder %s81, 0
      %s84 = sadd.s32 %s83, 1
      %s85 = scalar_select %p82, %s83, %s84
      %p88 = pneg %p82
      %p89 = scmp.eq.s32.totalorder %s23, 1
      %p90 = por %p88, %p89
      %p91 = scmp.ne.s32.totalorder %s83, %s86
      %p92 = scmp.eq.s32.totalorder %s23, 0
      %p93 = por %p91, %p92
      %p94 = scmp.ne.s32.totalorder %s83, %s86
      %p95 = scmp.eq.s32.totalorder %s28, 1
      %p96 = por %p94, %p95
      %p97 = scmp.ne.s32.totalorder %s86, %s87
      %p98 = scmp.eq.s32.totalorder %s28, 0
      %p99 = por %p97, %p98
      %p100 = scmp.ne.s32.totalorder %s86, %s87
      %p101 = scmp.eq.s32.totalorder %s29, 1
      %p102 = por %p100, %p101
      %p104 = scmp.ne.s32.totalorder %s87, %s103
      %p105 = scmp.eq.s32.totalorder %s29, 0
      %p106 = por %p104, %p105
      %s107 = ssub.s32 %s30, %s42
      %p108 = scmp.eq.s32.totalorder %s107, 0
      %s110 = sadd.s32 %s109, 1
      %s111 = scalar_select %p108, %s109, %s110
      %p114 = pneg %p108
      %p115 = scmp.eq.s32.totalorder %s23, 1
      %p116 = por %p114, %p115
      %p117 = scmp.ne.s32.totalorder %s109, %s112
      %p118 = scmp.eq.s32.totalorder %s23, 0
      %p119 = por %p117, %p118
      %p120 = scmp.ne.s32.totalorder %s109, %s112
      %p121 = scmp.eq.s32.totalorder %s28, 1
      %p122 = por %p120, %p121
      %p123 = scmp.ne.s32.totalorder %s112, %s113
      %p124 = scmp.eq.s32.totalorder %s28, 0
      %p125 = por %p123, %p124
      %p126 = scmp.ne.s32.totalorder %s112, %s113
      %p127 = scmp.eq.s32.totalorder %s29, 1
      %p128 = por %p126, %p127
      %p130 = scmp.ne.s32.totalorder %s113, %s129
      %p131 = scmp.eq.s32.totalorder %s29, 0
      %p132 = por %p130, %p131
      %s133 = ssub.s32 %s30, %s42
      %p134 = scmp.eq.s32.totalorder %s133, 0
      %s136 = sadd.s32 %s135, 1
      %s137 = scalar_select %p134, %s135, %s136
      %p140 = pneg %p134
      %p141 = scmp.eq.s32.totalorder %s23, 1
      %p142 = por %p140, %p141
      %p143 = scmp.ne.s32.totalorder %s135, %s138
      %p144 = scmp.eq.s32.totalorder %s23, 0
      %p145 = por %p143, %p144
      %p146 = scmp.ne.s32.totalorder %s135, %s138
      %p147 = scmp.eq.s32.totalorder %s28, 1
      %p148 = por %p146, %p147
      %p149 = scmp.ne.s32.totalorder %s138, %s139
      %p150 = scmp.eq.s32.totalorder %s28, 0
      %p151 = por %p149, %p150
      %p152 = scmp.ne.s32.totalorder %s138, %s139
      %p153 = scmp.eq.s32.totalorder %s29, 1
      %p154 = por %p152, %p153
      %p156 = scmp.ne.s32.totalorder %s139, %s155
      %p157 = scmp.eq.s32.totalorder %s29, 0
      %p158 = por %p156, %p157
      %s159 = ssub.s32 %s30, %s42
      %p160 = scmp.eq.s32.totalorder %s159, 0
      %s162 = sadd.s32 %s161, 1
      %s163 = scalar_select %p160, %s161, %s162
      %p166 = pneg %p160
      %p167 = scmp.eq.s32.totalorder %s23, 1
      %p168 = por %p166, %p167
      %p169 = scmp.ne.s32.totalorder %s161, %s164
      %p170 = scmp.eq.s32.totalorder %s23, 0
      %p171 = por %p169, %p170
      %p172 = scmp.ne.s32.totalorder %s161, %s164
      %p173 = scmp.eq.s32.totalorder %s28, 1
      %p174 = por %p172, %p173
      %p175 = scmp.ne.s32.totalorder %s164, %s165
      %p176 = scmp.eq.s32.totalorder %s28, 0
      %p177 = por %p175, %p176
      %p178 = scmp.ne.s32.totalorder %s164, %s165
      %p179 = scmp.eq.s32.totalorder %s29, 1
      %p180 = por %p178, %p179
      %p182 = scmp.ne.s32.totalorder %s165, %s181
      %p183 = scmp.eq.s32.totalorder %s29, 0
      %p184 = por %p182, %p183
      %p185 = scmp.le.s32.totalorder 1, %s23
      %p186 = scmp.lt.s32.totalorder %s23, 3
      %p187 = pnand %p185, %p186
      %p188 = pneg %p187
      // Predicated region
      $region9: #{tpu_custom_call.1} parent=5 // pred_check
        _
      $region10: #{tpu_custom_call.1} parent=5 // pred_check_branch
        %190 = sbr.rel (%p187) target = $region12
      $region11: #{tpu_custom_call.1} parent=5 // pred_region
        %s191 = ssub.s32 %s23, 1
      $region12: #{tpu_custom_call.1} parent=5 // pred_fallthru
        _
      %p192 = scmp.lt.s32.totalorder %s23, 2
      // Predicated region
      $region13: #{tpu_custom_call.1} parent=5 // pred_check
        %p193 = pneg %p192
      $region14: #{tpu_custom_call.1} parent=5 // pred_check_branch
        %195 = sbr.rel (%p193) target = $region16
      $region15: #{tpu_custom_call.1} parent=5 // pred_region
        // Predicated region
        $region17: #{tpu_custom_call.1} parent=15 // pred_check
          %p196 = pneg %p61
        $region18: #{tpu_custom_call.1} parent=15 // pred_check_branch
          %198 = sbr.rel (%p196) target = $region20
        $region19: #{tpu_custom_call.1} parent=15 // pred_region
          %s199 = sand.u32 %s51, 1
          %s200 = scalar_lea.sflag [#allocation3], %s199
          %s201 = sand.u32 %s51, 1
          %s202 = smul.addr %s201, 8
          %s203 = scalar_lea.vmem [#allocation2], %s202
          %s204 = sadd.s32 %s30, %s31
          %p205 = scmp.lt.s32.totalorder %s204, 1
          %s206 = scalar_select %p205, %s204, 1
          %s208 = ssub.s32 128, 128
          %209 = vsyncadd %s200, %s208
          %s210 = smul.addr %s206, 128
          %s211 = scalar_lea.hbm %s0, %s210
          %s213 = sshll.u32 %s203, 4
          %s214 = int_to_ptr.vmem [resolvable:$true] %s213
          %216 = dma.hbm_to_vmem [thread:$0]  %s211, 128, %s214, %s200
        $region20: #{tpu_custom_call.1} parent=15 // pred_fallthru
          _
        // Predicated region
        $region21: #{tpu_custom_call.1} parent=15 // pred_check
          %p217 = pneg %p93
        $region22: #{tpu_custom_call.1} parent=15 // pred_check_branch
          %219 = sbr.rel (%p217) target = $region24
        $region23: #{tpu_custom_call.1} parent=15 // pred_region
          %s220 = sand.u32 %s83, 1
          %s221 = scalar_lea.sflag [#allocation6], %s220
          %s222 = sand.u32 %s83, 1
          %s223 = smul.addr %s222, 8
          %s224 = scalar_lea.vmem [#allocation5], %s223
          %s225 = sadd.s32 %s30, %s31
          %p226 = scmp.lt.s32.totalorder %s225, 1
          %s227 = scalar_select %p226, %s225, 1
          %s229 = ssub.s32 128, 128
          %230 = vsyncadd %s221, %s229
          %s231 = smul.addr %s227, 128
          %s232 = scalar_lea.hbm %s1, %s231
          %s234 = sshll.u32 %s224, 4
          %s235 = int_to_ptr.vmem [resolvable:$true] %s234
          %237 = dma.hbm_to_vmem [thread:$0]  %s232, 128, %s235, %s221
        $region24: #{tpu_custom_call.1} parent=15 // pred_fallthru
          _
      $region16: #{tpu_custom_call.1} parent=5 // pred_fallthru
        _
      %p238 = scmp.le.s32.totalorder 1, %s23
      %p239 = scmp.lt.s32.totalorder %s23, 3
      %p240 = pnand %p238, %p239
      %p241 = pneg %p240
      // Predicated region
      $region25: #{tpu_custom_call.1} parent=5 // pred_check
        _
      $region26: #{tpu_custom_call.1} parent=5 // pred_check_branch
        %243 = sbr.rel (%p240) target = $region28
      $region27: #{tpu_custom_call.1} parent=5 // pred_region
        %s244 = ssub.s32 %s23, 1
        %s245 = sand.u32 %s54, 1
        %s246 = scalar_lea.sflag [#allocation3], %s245
        %s247 = sand.u32 %s54, 1
        %s248 = smul.addr %s247, 8
        %s249 = scalar_lea.vmem [#allocation2], %s248
        // Predicated region
        $region29: #{tpu_custom_call.1} parent=27 // pred_check
          %p250 = pneg %p67
        $region30: #{tpu_custom_call.1} parent=27 // pred_check_branch
          %252 = sbr.rel (%p250) target = $region32
        $region31: #{tpu_custom_call.1} parent=27 // pred_region
          %253 = dma.done %s246, 128
        $region32: #{tpu_custom_call.1} parent=27 // pred_fallthru
          _
        %s254 = sand.u32 %s86, 1
        %s255 = scalar_lea.sflag [#allocation6], %s254
        %s256 = sand.u32 %s86, 1
        %s257 = smul.addr %s256, 8
        %s258 = scalar_lea.vmem [#allocation5], %s257
        // Predicated region
        $region33: #{tpu_custom_call.1} parent=27 // pred_check
          %p259 = pneg %p99
        $region34: #{tpu_custom_call.1} parent=27 // pred_check_branch
          %261 = sbr.rel (%p259) target = $region36
        $region35: #{tpu_custom_call.1} parent=27 // pred_region
          %262 = dma.done %s255, 128
        $region36: #{tpu_custom_call.1} parent=27 // pred_fallthru
          _
        %s263 = sand.u32 %s54, 1
        %s264 = scalar_lea.sflag [#allocation3], %s263
        %s265 = sand.u32 %s54, 1
        %s266 = smul.addr %s265, 8
        %s267 = scalar_lea.vmem [#allocation2], %s266
        %p268 = pneg %p67
        %p269 = pneg %p64
        %s270 = sand.u32 %s86, 1
        %s271 = scalar_lea.sflag [#allocation6], %s270
        %s272 = sand.u32 %s86, 1
        %s273 = smul.addr %s272, 8
        %s274 = scalar_lea.vmem [#allocation5], %s273
        %p275 = pneg %p99
        %p276 = pneg %p96
        %p277 = pneg %p125
        %p278 = pneg %p122
        %s279 = sand.u32 %s112, 1
        %s280 = scalar_lea.sflag [#allocation4], %s279
        %s281 = sand.u32 %s112, 1
        %s282 = smul.addr %s281, 8
        %s283 = scalar_lea.vmem [#allocation7], %s282
        %p284 = pneg %p151
        %p285 = pneg %p148
        %s286 = sand.u32 %s28, 1
        %s287 = scalar_lea.sflag [#allocation9], %s286
        %s288 = sand.u32 %s138, 1
        %s289 = smul.addr %s288, 8
        %s290 = scalar_lea.vmem [#allocation8], %s289
        %p291 = pneg %p177
        %p292 = pneg %p174
        %s293 = sand.u32 %s28, 1
        %s294 = scalar_lea.sflag [#allocation9], %s293
        %s295 = sand.u32 %s164, 1
        %s296 = smul.addr %s295, 8
        %s297 = scalar_lea.vmem [#allocation10], %s296
        %s298 = sadd.s32 %s32, %s33
        %p299 = scmp.lt.s32.totalorder %s298, 1
        %s300 = scalar_select %p299, %s298, 1
        %s301 = sadd.s32 %s32, %s33
        %p302 = scmp.lt.s32.totalorder %s301, 1
        %s303 = scalar_select %p302, %s301, 1
        %p304 = scmp.eq.s32.totalorder %s33, 0
        // Predicated region
        $region37: #{tpu_custom_call.1} parent=27 // pred_check
          %p305 = pneg %p304
        $region38: #{tpu_custom_call.1} parent=27 // pred_check_branch
          %307 = sbr.rel (%p305) target = $region40
        $region39: #{tpu_custom_call.1} parent=27 // pred_region
          %308 = vst [vmem:[%s283] sm:$0xff] 0.0
          %309 = vst [vmem:[%s290] sm:$0xff] 0.0
          %310 = vst [vmem:[%s297] sm:$0xff] 0.0
        $region40: #{tpu_custom_call.1} parent=27 // pred_fallthru
          _
        %s311 = sadd.s32 %s32, %s33
        %s312 = smul.u32 %s311, 8
        %v313 = vld [vmem:[%s249] sm:$0xff]
        %v314 = vld [vmem:[%s258] sm:$0xff]
        %s315 = sadd.s32 %s312, 8
        %p316 = scmp.le.s32.totalorder %s315, 16
        // Predicated region
        $region41: #{tpu_custom_call.1} parent=27 // pred_check
          %p317 = pneg %p316
        $region42: #{tpu_custom_call.1} parent=27 // pred_check_branch
          %319 = sbr.rel (%p317) target = $region44
        $region43: #{tpu_custom_call.1} parent=27 // pred_region
          %v320 = vand.u32 2147483647, %v313
          %v321 = vsub.f32 0.0, %v320
          %v322 = vmul.f32 %v321, 1.442695
          %v323 = vpow.pop %v322
          %v324 = vadd.f32 %v323, 1.0
          %v325 = vlog2.pop %v324
          %v326 = vmul.f32 %v325, 0.6931472
          %v327 = vrcp.pop %v324
          %v328 = vmul.f32 1.0, %v327
          %vm329 = vcmp.ge.f32.partialorder %v313, 0.0
          %v330 = vmul.f32 %v323, %v328
          %v331 = vsel %vm329, %v328, %v330
          %v332 = vmin.f32 %v313, 0.0
          %v333 = vsub.f32 %v332, %v326
          %v334 = vmax.f32 %v333, -100.0
          %v335 = vsub.f32 0.0, %v313
          %v336 = vmin.f32 %v335, 0.0
          %v337 = vsub.f32 %v336, %v326
          %v338 = vmax.f32 %v337, -100.0
          %v339 = vsub.f32 %v334, %v338
          %v340 = vmul.f32 %v314, %v339
          %v341 = vadd.f32 %v338, %v340
          %v342 = vsub.f32 0.0, %v341
          %v343 = vld [vmem:[%s283] sm:$0xff]
          %v344 = vmul.f32 %v331, %v314
          %v345 = vadd.f32 %v344, 0.0
          %v346 = vadd.f32 %v343, %v345
          %347 = vst [vmem:[%s283] sm:$0xff] %v346
          %v348 = vld [vmem:[%s290] sm:$0xff]
          %v349 = vadd.f32 %v331, %v314
          %v350 = vadd.f32 %v349, 0.0
          %v351 = vadd.f32 %v348, %v350
          %352 = vst [vmem:[%s290] sm:$0xff] %v351
          %v353 = vld [vmem:[%s297] sm:$0xff]
          %v354 = vadd.f32 %v342, 0.0
          %v355 = vadd.f32 %v353, %v354
          %356 = vst [vmem:[%s297] sm:$0xff] %v355
        $region44: #{tpu_custom_call.1} parent=27 // pred_fallthru
          _
        %p357 = scmp.gt.s32.totalorder %s315, 16
        // Predicated region
        $region45: #{tpu_custom_call.1} parent=27 // pred_check
          %p358 = pneg %p357
        $region46: #{tpu_custom_call.1} parent=27 // pred_check_branch
          %360 = sbr.rel (%p358) target = $region48
        $region47: #{tpu_custom_call.1} parent=27 // pred_region
          %v361 = vlaneseq
          %v362 = vshrl.u32 %v361, 7
          %v363 = vstv %s312
          %v364 = vadd.s32 %v362, %v363
          %vm365 = vcmp.lt.s32.totalorder %v364, 16
          %v366 = vsel %vm365, %v313, -1e+09
          %v367 = vsel %vm365, %v314, 0.0
          %v368 = vand.u32 2147483647, %v366
          %v369 = vsub.f32 0.0, %v368
          %v370 = vmul.f32 %v369, 1.442695
          %v371 = vpow.pop %v370
          %v372 = vadd.f32 %v371, 1.0
          %v373 = vlog2.pop %v372
          %v374 = vmul.f32 %v373, 0.6931472
          %v375 = vrcp.pop %v372
          %v376 = vmul.f32 1.0, %v375
          %vm377 = vcmp.ge.f32.partialorder %v366, 0.0
          %v378 = vmul.f32 %v371, %v376
          %v379 = vsel %vm377, %v376, %v378
          %v380 = vmin.f32 %v366, 0.0
          %v381 = vsub.f32 %v380, %v374
          %v382 = vmax.f32 %v381, -100.0
          %v383 = vsub.f32 0.0, %v366
          %v384 = vmin.f32 %v383, 0.0
          %v385 = vsub.f32 %v384, %v374
          %v386 = vmax.f32 %v385, -100.0
          %v387 = vsub.f32 %v382, %v386
          %v388 = vmul.f32 %v367, %v387
          %v389 = vadd.f32 %v386, %v388
          %v390 = vsub.f32 0.0, %v389
          %v391 = vld [vmem:[%s283] sm:$0xff]
          %v392 = vmul.f32 %v379, %v367
          %v393 = vadd.f32 %v392, 0.0
          %v394 = vadd.f32 %v391, %v393
          %395 = vst [vmem:[%s283] sm:$0xff] %v394
          %v396 = vld [vmem:[%s290] sm:$0xff]
          %v397 = vadd.f32 %v379, %v367
          %v398 = vadd.f32 %v397, 0.0
          %v399 = vadd.f32 %v396, %v398
          %400 = vst [vmem:[%s290] sm:$0xff] %v399
          %v401 = vld [vmem:[%s297] sm:$0xff]
          %v402 = vadd.f32 %v390, 0.0
          %v403 = vadd.f32 %v401, %v402
          %404 = vst [vmem:[%s297] sm:$0xff] %v403
        $region48: #{tpu_custom_call.1} parent=27 // pred_fallthru
          _
        %s405 = sand.u32 %s112, 1
        %s406 = scalar_lea.sflag [#allocation4], %s405
        %s407 = sand.u32 %s112, 1
        %s408 = smul.addr %s407, 8
        %s409 = scalar_lea.vmem [#allocation7], %s408
        %s410 = sand.u32 %s28, 1
        %s411 = scalar_lea.sflag [#allocation9], %s410
        %s412 = sand.u32 %s138, 1
        %s413 = smul.addr %s412, 8
        %s414 = scalar_lea.vmem [#allocation8], %s413
        %s415 = sand.u32 %s28, 1
        %s416 = scalar_lea.sflag [#allocation9], %s415
        %s417 = sand.u32 %s164, 1
        %s418 = smul.addr %s417, 8
        %s419 = scalar_lea.vmem [#allocation10], %s418
        // Predicated region
        $region49: #{tpu_custom_call.1} parent=27 // pred_check
          %p420 = pneg %p122
        $region50: #{tpu_custom_call.1} parent=27 // pred_check_branch
          %422 = sbr.rel (%p420) target = $region52
        $region51: #{tpu_custom_call.1} parent=27 // pred_region
          %s424 = ssub.s32 128, 128
          %425 = vsyncadd %s406, %s424
          %s426 = smul.addr %s32, 128
          %s427 = scalar_lea.hbm %s2, %s426
          %s429 = sshll.u32 %s409, 4
          %s430 = int_to_ptr.vmem [resolvable:$true] %s429
          %432 = dma.vmem_to_hbm [thread:$0]  %s430, 128, %s427, %s406
        $region52: #{tpu_custom_call.1} parent=27 // pred_fallthru
          _
        // Predicated region
        $region53: #{tpu_custom_call.1} parent=27 // pred_check
          %p433 = pneg %p148
        $region54: #{tpu_custom_call.1} parent=27 // pred_check_branch
          %435 = sbr.rel (%p433) target = $region56
        $region55: #{tpu_custom_call.1} parent=27 // pred_region
          %s437 = ssub.s32 128, 128
          %438 = vsyncadd %s411, %s437
          %s439 = smul.addr %s32, 128
          %s440 = scalar_lea.hbm %s3, %s439
          %s442 = sshll.u32 %s414, 4
          %s443 = int_to_ptr.vmem [resolvable:$true] %s442
          %445 = dma.vmem_to_hbm [thread:$0]  %s443, 128, %s440, %s411
        $region56: #{tpu_custom_call.1} parent=27 // pred_fallthru
          _
        // Predicated region
        $region57: #{tpu_custom_call.1} parent=27 // pred_check
          %p446 = pneg %p174
        $region58: #{tpu_custom_call.1} parent=27 // pred_check_branch
          %448 = sbr.rel (%p446) target = $region60
        $region59: #{tpu_custom_call.1} parent=27 // pred_region
          %s450 = ssub.s32 128, 128
          %451 = vsyncadd %s416, %s450
          %s452 = smul.addr %s32, 128
          %s453 = scalar_lea.hbm %s4, %s452
          %s455 = sshll.u32 %s419, 4
          %s456 = int_to_ptr.vmem [resolvable:$true] %s455
          %458 = dma.vmem_to_hbm [thread:$0]  %s456, 128, %s453, %s416
        $region60: #{tpu_custom_call.1} parent=27 // pred_fallthru
          _
      $region28: #{tpu_custom_call.1} parent=5 // pred_fallthru
        _
      %p459 = scmp.le.s32.totalorder 2, %s23
      // Predicated region
      $region61: #{tpu_custom_call.1} parent=5 // pred_check
        %p460 = pneg %p459
      $region62: #{tpu_custom_call.1} parent=5 // pred_check_branch
        %462 = sbr.rel (%p460) target = $region64
      $region63: #{tpu_custom_call.1} parent=5 // pred_region
        %s463 = ssub.s32 %s23, 2
        // Predicated region
        $region65: #{tpu_custom_call.1} parent=63 // pred_check
          %p464 = pneg %p128
        $region66: #{tpu_custom_call.1} parent=63 // pred_check_branch
          %466 = sbr.rel (%p464) target = $region68
        $region67: #{tpu_custom_call.1} parent=63 // pred_region
          %s467 = sand.u32 %s113, 1
          %s468 = scalar_lea.sflag [#allocation4], %s467
          %s469 = sand.u32 %s113, 1
          %s470 = smul.addr %s469, 8
          %s471 = scalar_lea.vmem [#allocation7], %s470
          %472 = dma.done %s468, 128
        $region68: #{tpu_custom_call.1} parent=63 // pred_fallthru
          _
        // Predicated region
        $region69: #{tpu_custom_call.1} parent=63 // pred_check
          %p473 = pneg %p154
        $region70: #{tpu_custom_call.1} parent=63 // pred_check_branch
          %475 = sbr.rel (%p473) target = $region72
        $region71: #{tpu_custom_call.1} parent=63 // pred_region
          %s476 = sand.u32 %s29, 1
          %s477 = scalar_lea.sflag [#allocation9], %s476
          %s478 = sand.u32 %s139, 1
          %s479 = smul.addr %s478, 8
          %s480 = scalar_lea.vmem [#allocation8], %s479
          %481 = dma.done %s477, 128
        $region72: #{tpu_custom_call.1} parent=63 // pred_fallthru
          _
        // Predicated region
        $region73: #{tpu_custom_call.1} parent=63 // pred_check
          %p482 = pneg %p180
        $region74: #{tpu_custom_call.1} parent=63 // pred_check_branch
          %484 = sbr.rel (%p482) target = $region76
        $region75: #{tpu_custom_call.1} parent=63 // pred_region
          %s485 = sand.u32 %s29, 1
          %s486 = scalar_lea.sflag [#allocation9], %s485
          %s487 = sand.u32 %s165, 1
          %s488 = smul.addr %s487, 8
          %s489 = scalar_lea.vmem [#allocation10], %s488
          %490 = dma.done %s486, 128
        $region76: #{tpu_custom_call.1} parent=63 // pred_fallthru
          _
      $region64: #{tpu_custom_call.1} parent=5 // pred_fallthru
        _
    $region6: #{tpu_custom_call.1} parent=1 // loop_footer
      %s27 = sadd.s32 1, %s23
    $region7: #{tpu_custom_call.1} parent=1 // loop_footer_branch
      %22 = sbr.rel target = $region3
    $region8: #{tpu_custom_call.1} parent=1 // loop_exit
      _
    %491 = vsyncpa [#allocation3], 1
    %s492 = scalar_lea.sflag [#allocation3], 1
    %493 = vsyncpa %s492, 1
    %494 = vsyncpa [#allocation6], 1
    %s495 = scalar_lea.sflag [#allocation6], 1
    %496 = vsyncpa %s495, 1
    %497 = vsyncpa [#allocation4], 1
    %s498 = scalar_lea.sflag [#allocation4], 1
    %499 = vsyncpa %s498, 1
    %500 = vsyncpa [#allocation9], 1
    %s501 = scalar_lea.sflag [#allocation9], 1
    %502 = vsyncpa %s501, 1

</llo_original>
